<compile_context>
chip_gen: v6e
topology: v6e:2x2x1
jax: 0.10.0
libtpu: 0.0.40
codegen_flags: <defaults>
</compile_context>

<pallas_src>
import functools

import jax
import jax.numpy as jnp
from jax import lax
from jax.experimental import pallas as pl
from jax.experimental.pallas import tpu as pltpu


LN_EPS = 1e-5  # nn.LayerNorm default eps


def _cdiv(a, b):
    return -(-a // b)


def _round_up(n, m):
    return _cdiv(n, m) * m


def _vmem_limit_bytes():
    """Generation-aware VMEM limit (v5e/v6e: 128 MiB physical, v7x: 64 MiB)."""
    try:
        cap = int(pltpu.get_tpu_info().vmem_capacity_bytes)
    except Exception:
        cap = 64 * 1024 * 1024
    return int(min(100 * 2**20, max(32 * 2**20, cap - 16 * 2**20)))


def _pick_row_tile(rows, d_model, has_context, budget, tm=None):
    """Row-tile from a VMEM model + enough grid steps to feed 2 TCs (v7x)."""
    D = d_model
    if tm is None:
        tm = 1024 if D <= 256 else 512       # large tiles amortize ~0.35us/step
    n_mm = 6 if has_context else 5
    weight_bytes = n_mm * D * D * 2 + 7 * D * 4          # resident bf16 W + f32 b
    n_io = 3 if has_context else 2                       # x, (c), out tiles
    per_row = n_io * 2 * D * 4 + 8 * D * 4               # 2x-buffered I/O + f32 temps
    avail = max(budget - weight_bytes, 16 * per_row)
    while tm > 64 and tm * per_row > avail:              # shrinks on v7x (64 MiB)
        tm //= 2
    # Balance tiles; keep >=4 steps when rows allow (v7x: 2 TensorCores share
    # the "parallel" grid axis) but never shred below ~256-row tiles.
    steps = max(_cdiv(rows, tm), min(4, _cdiv(rows, 256)))
    tm_eff = _round_up(_cdiv(rows, steps), 8)
    if rows >= 8:
        tm_eff = min(tm_eff, (rows // 8) * 8)  # keep every block inside the array
    tm_eff = max(8, tm_eff)
    return tm_eff, _cdiv(rows, tm_eff)


def _grn_kernel(*refs, d_model, compute_dtype, has_context):
    if has_context:
        (x_ref, c_ref, w1, w2, w3, w4, wg1, wg2,
         b12, b3, b4, bg1, bg2, gamma, beta, o_ref) = refs
    else:
        (x_ref, w1, w3, w4, wg1, wg2,
         b12, b3, b4, bg1, bg2, gamma, beta, o_ref) = refs

    f32 = jnp.float32
    xb = x_ref[...].astype(compute_dtype)      # in-kernel cast (no HBM pre-pass)

    # eta_2 = linear1(x) + linear2(c)          (b1 + b2 pre-folded into b12)
    eta2 = jnp.dot(xb, w1[...], preferred_element_type=f32) + b12[...]
    if has_context:
        cb = c_ref[...].astype(compute_dtype)
        eta2 = eta2 + jnp.dot(cb, w2[...], preferred_element_type=f32)

    # eta_1 = ELU(linear3(eta_2))  (exp(h)-1; f32 abs error vs expm1 < 1.5e-7)
    h3 = jnp.dot(eta2.astype(compute_dtype), w3[...],
                 preferred_element_type=f32) + b3[...]
    eta1 = jnp.where(h3 > 0.0, h3, jnp.exp(h3) - 1.0).astype(compute_dtype)

    # GLU: sigmoid(glu_lin1(eta_1)) * glu_lin2(eta_1)
    gate = jax.nn.sigmoid(
        jnp.dot(eta1, wg1[...], preferred_element_type=f32) + bg1[...])
    val = jnp.dot(eta1, wg2[...], preferred_element_type=f32) + bg2[...]
    glu = gate * val

    # linear4(x) skip path, deferred to keep the f32 live ranges short.
    y = jnp.dot(xb, w4[...], preferred_element_type=f32) + b4[...] + glu

    # LayerNorm — two-pass statistics (subtract mean, then sum of squares).
    inv_d = 1.0 / float(d_model)
    mean = jnp.sum(y, axis=-1, keepdims=True) * inv_d
    yc = y - mean
    var = jnp.sum(yc * yc, axis=-1, keepdims=True) * inv_d
    yn = yc * lax.rsqrt(var + LN_EPS)
    o_ref[...] = (yn * gamma[...] + beta[...]).astype(o_ref.dtype)


@functools.partial(jax.jit, static_argnames=("tm", "matmul_dtype", "out_dtype"))
def gated_residual_network(x, params, c=None, *, tm=None,
                           matmul_dtype=jnp.bfloat16, out_dtype=None):
    """x (and optional c): (batch, seq, d_model); params stored (in, out)."""
    B, S, D = x.shape
    rows = B * S
    has_context = c is not None
    out_dt = jnp.dtype(x.dtype if out_dtype is None else out_dtype)

    # Free, contiguous reshapes — no padding / casting passes through HBM.
    x2 = x.reshape(rows, D)
    c2 = c.reshape(rows, D) if has_context else None

    vmem_limit = _vmem_limit_bytes()
    tm_eff, n_steps = _pick_row_tile(rows, D, has_context,
                                     budget=(3 * vmem_limit) // 4, tm=tm)

    # TODO(synk): if d_model grows large enough that the resident bf16 weights
    # (~{5,6}*D^2*2 bytes) exceed the VMEM budget, a K/N-blocked weight
    # pipeline (and optionally an fp8 weight path on v7x) would be needed.

    def w_(k):
        return params[k].astype(matmul_dtype)

    def b_(v):
        return v.reshape(1, D).astype(jnp.float32)

    if has_context:
        weight_ops = [w_("w1"), w_("w2"), w_("w3"), w_("w4"), w_("wg1"), w_("wg2")]
    else:
        weight_ops = [w_("w1"), w_("w3"), w_("w4"), w_("wg1"), w_("wg2")]
    bias_ops = [b_(params["b1"] + params["b2"]), b_(params["b3"]),
                b_(params["b4"]), b_(params["bg1"]), b_(params["bg2"]),
                b_(params["gamma"]), b_(params["beta"])]

    row_spec = pl.BlockSpec((tm_eff, D), lambda i: (i, 0))
    # Grid-invariant operands: resident once in VMEM, never re-pipelined.
    vmem_spec = pl.BlockSpec(memory_space=pltpu.MemorySpace.VMEM)

    operands = [x2] + ([c2] if has_context else []) + weight_ops + bias_ops
    in_specs = ([row_spec] * (2 if has_context else 1)
                + [vmem_spec] * (len(weight_ops) + len(bias_ops)))

    n_mm = 6 if has_context else 5
    in_itemsize = jnp.dtype(x.dtype).itemsize
    cost = pl.CostEstimate(
        flops=2 * rows * D * D * n_mm,
        transcendentals=2 * rows * D,                     # exp (ELU) + sigmoid
        bytes_accessed=(rows * D * in_itemsize * (2 if has_context else 1)
                        + n_mm * D * D * jnp.dtype(matmul_dtype).itemsize
                        + 7 * D * 4
                        + rows * D * out_dt.itemsize),
    )

    kernel = functools.partial(_grn_kernel, d_model=D,
                               compute_dtype=matmul_dtype,
                               has_context=has_context)

    out = pl.pallas_call(
        kernel,
        out_shape=jax.ShapeDtypeStruct((rows, D), out_dt),
        grid_spec=pltpu.PrefetchScalarGridSpec(
            num_scalar_prefetch=0,
            grid=(n_steps,),
            in_specs=in_specs,
            out_specs=pl.BlockSpec((tm_eff, D), lambda i: (i, 0)),
        ),
        compiler_params=pltpu.CompilerParams(
            dimension_semantics=("parallel",),
            vmem_limit_bytes=vmem_limit,
        ),
        cost_estimate=cost,
    )(*operands)

    return out.reshape(B, S, D)


def init_params(key, d_model, dtype=jnp.float32):
    """Deterministic synthetic parameter init (PyTorch-like scales)."""
    ks = jax.random.split(key, 12)
    bound = 1.0 / jnp.sqrt(d_model)

    def lin(kw, kb):
        # stored as (in, out); equivalent to PyTorch (out, in) transposed
        w = jax.random.uniform(kw, (d_model, d_model), dtype, -bound, bound)
        b = jax.random.uniform(kb, (1, d_model), dtype, -bound, bound)
        return w, b

    w1, b1 = lin(ks[0], ks[1])
    w2, b2 = lin(ks[2], ks[3])
    w3, b3 = lin(ks[4], ks[5])
    w4, b4 = lin(ks[6], ks[7])
    wg1, bg1 = lin(ks[8], ks[9])
    wg2, bg2 = lin(ks[10], ks[11])
    gamma = jnp.ones((1, d_model), dtype)   # nn.LayerNorm defaults
    beta = jnp.zeros((1, d_model), dtype)
    return dict(w1=w1, b1=b1, w2=w2, b2=b2, w3=w3, b3=b3, w4=w4, b4=b4,
                wg1=wg1, bg1=bg1, wg2=wg2, bg2=bg2, gamma=gamma, beta=beta)


def grn_reference(x, c, p, matmul_dtype=jnp.float32):
    """Pure-JAX reference (same bf16-in / f32-accumulate matmul policy)."""
    md = matmul_dtype

    def mm(a, w):
        return jnp.dot(a.astype(md), w.astype(md),
                       preferred_element_type=jnp.float32)

    if c is None:
        c = jnp.zeros_like(x)
    eta2 = mm(x, p["w1"]) + p["b1"] + mm(c, p["w2"]) + p["b2"]
    h3 = mm(eta2, p["w3"]) + p["b3"]
    eta1 = jnp.where(h3 > 0.0, h3, jnp.exp(h3) - 1.0)
    glu = jax.nn.sigmoid(mm(eta1, p["wg1"]) + p["bg1"]) * \
        (mm(eta1, p["wg2"]) + p["bg2"])
    y = mm(x, p["w4"]) + p["b4"] + glu
    mean = jnp.mean(y, -1, keepdims=True)
    var = jnp.mean((y - mean) ** 2, -1, keepdims=True)
    return (y - mean) / jnp.sqrt(var + LN_EPS) * p["gamma"] + p["beta"]


if __name__ == "__main__":
    key = jax.random.PRNGKey(0)
    k_x, k_c, k_p = jax.random.split(key, 3)

    # Case 1: c=None fast path, small d_model (< 128 lanes), exact row tiles.
    batch, seq, d_model = 2, 8, 32
    x = jax.random.normal(k_x, (batch, seq, d_model), jnp.float32)
    params = init_params(k_p, d_model)
    out1 = jax.block_until_ready(gated_residual_network(x, params))
    ref1 = grn_reference(x, None, params, matmul_dtype=jnp.bfloat16)
    assert out1.shape == (batch, seq, d_model)
    assert jnp.max(jnp.abs(out1 - ref1)) < 2e-2, "mismatch vs reference (c=None)"

    # Case 2: explicit context, non-128 d_model, rows not divisible by the row
    # tile (exercises the partial-last-block masking and a multi-step grid).
    B2, S2, D2 = 3, 40, 96
    x2 = jax.random.normal(k_x, (B2, S2, D2), jnp.float32)
    c2 = jax.random.normal(k_c, (B2, S2, D2), jnp.float32)
    params2 = init_params(k_p, D2)
    out2 = jax.block_until_ready(gated_residual_network(x2, params2, c2, tm=64))
    ref2 = grn_reference(x2, c2, params2, matmul_dtype=jnp.bfloat16)
    assert out2.shape == (B2, S2, D2)
    assert jnp.max(jnp.abs(out2 - ref2)) < 2e-2, "mismatch vs reference (with c)"

    # Case 3: lane-dense d_model (multiple of 128) with rows not a multiple of
    # 8 (partial last block, no HBM padding anywhere).
    B3, S3, D3 = 1, 13, 128
    x3 = jax.random.normal(k_x, (B3, S3, D3), jnp.float32)
    c3 = jax.random.normal(k_c, (B3, S3, D3), jnp.float32)
    params3 = init_params(k_p, D3)
    out3 = jax.block_until_ready(gated_residual_network(x3, params3, c3))
    ref3 = grn_reference(x3, c3, params3, matmul_dtype=jnp.bfloat16)
    assert out3.shape == (B3, S3, D3)
    assert jnp.max(jnp.abs(out3 - ref3)) < 2e-2, "mismatch vs reference (ragged rows)"

    print("KERNEL_OK")
</pallas_src>

<mosaic_0001>
module attributes {stable_mosaic.version = 11 : i64} {
  func.func @_grn_kernel(%arg0: i32, %arg1: memref<16x32xf32, #tpu.memory_space<vmem>>, %arg2: memref<32x32xbf16, #tpu.memory_space<vmem>>, %arg3: memref<32x32xbf16, #tpu.memory_space<vmem>>, %arg4: memref<32x32xbf16, #tpu.memory_space<vmem>>, %arg5: memref<32x32xbf16, #tpu.memory_space<vmem>>, %arg6: memref<32x32xbf16, #tpu.memory_space<vmem>>, %arg7: memref<1x32xf32, #tpu.memory_space<vmem>>, %arg8: memref<1x32xf32, #tpu.memory_space<vmem>>, %arg9: memref<1x32xf32, #tpu.memory_space<vmem>>, %arg10: memref<1x32xf32, #tpu.memory_space<vmem>>, %arg11: memref<1x32xf32, #tpu.memory_space<vmem>>, %arg12: memref<1x32xf32, #tpu.memory_space<vmem>>, %arg13: memref<1x32xf32, #tpu.memory_space<vmem>>, %arg14: memref<16x32xf32, #tpu.memory_space<vmem>>) attributes {dimension_semantics = [#tpu.dimension_semantics<parallel>], iteration_bounds = array<i64: 1>, scalar_prefetch = 0 : i64, scratch_operands = 0 : i64, tpu.core_type = #tpu.core_type<tc>, window_params = [{transform_indices = @transform_0, window_bounds = array<i64: 16, 32>}, {pipeline_mode = #tpu.pipeline_mode<synchronous>, transform_indices = @transform_1, window_bounds = array<i64: 32, 32>}, {pipeline_mode = #tpu.pipeline_mode<synchronous>, transform_indices = @transform_2, window_bounds = array<i64: 32, 32>}, {pipeline_mode = #tpu.pipeline_mode<synchronous>, transform_indices = @transform_3, window_bounds = array<i64: 32, 32>}, {pipeline_mode = #tpu.pipeline_mode<synchronous>, transform_indices = @transform_4, window_bounds = array<i64: 32, 32>}, {pipeline_mode = #tpu.pipeline_mode<synchronous>, transform_indices = @transform_5, window_bounds = array<i64: 32, 32>}, {pipeline_mode = #tpu.pipeline_mode<synchronous>, transform_indices = @transform_6, window_bounds = array<i64: 1, 32>}, {pipeline_mode = #tpu.pipeline_mode<synchronous>, transform_indices = @transform_7, window_bounds = array<i64: 1, 32>}, {pipeline_mode = #tpu.pipeline_mode<synchronous>, transform_indices = @transform_8, window_bounds = array<i64: 1, 32>}, {pipeline_mode = #tpu.pipeline_mode<synchronous>, transform_indices = @transform_9, window_bounds = array<i64: 1, 32>}, {pipeline_mode = #tpu.pipeline_mode<synchronous>, transform_indices = @transform_10, window_bounds = array<i64: 1, 32>}, {pipeline_mode = #tpu.pipeline_mode<synchronous>, transform_indices = @transform_11, window_bounds = array<i64: 1, 32>}, {pipeline_mode = #tpu.pipeline_mode<synchronous>, transform_indices = @transform_12, window_bounds = array<i64: 1, 32>}, {transform_indices = @transform_13, window_bounds = array<i64: 16, 32>}]} {
    %c0 = arith.constant 0 : index
    %c0_0 = arith.constant 0 : index
    %0 = vector.load %arg1[%c0, %c0_0] : memref<16x32xf32, #tpu.memory_space<vmem>>, vector<16x32xf32>
    %1 = arith.truncf %0 : vector<16x32xf32> to vector<16x32xbf16>
    %c0_1 = arith.constant 0 : index
    %c0_2 = arith.constant 0 : index
    %2 = vector.load %arg2[%c0_1, %c0_2] : memref<32x32xbf16, #tpu.memory_space<vmem>>, vector<32x32xbf16>
    %cst = arith.constant dense<0.000000e+00> : vector<16x32xf32>
    %3 = tpu.matmul %1, %2, %cst {dimension_numbers = #tpu.dot_dimension_numbers<[1], [0], [0], [1], [0, 0, 1, 1], [], []>} : vector<16x32xbf16>, vector<32x32xbf16>, vector<16x32xf32> -> vector<16x32xf32>
    %c0_3 = arith.constant 0 : index
    %c0_4 = arith.constant 0 : index
    %4 = vector.load %arg7[%c0_3, %c0_4] : memref<1x32xf32, #tpu.memory_space<vmem>>, vector<1x32xf32>
    %5 = vector.broadcast %4 : vector<1x32xf32> to vector<16x32xf32>
    %6 = arith.addf %3, %5 : vector<16x32xf32>
    %7 = arith.truncf %6 : vector<16x32xf32> to vector<16x32xbf16>
    %c0_5 = arith.constant 0 : index
    %c0_6 = arith.constant 0 : index
    %8 = vector.load %arg3[%c0_5, %c0_6] : memref<32x32xbf16, #tpu.memory_space<vmem>>, vector<32x32xbf16>
    %cst_7 = arith.constant dense<0.000000e+00> : vector<16x32xf32>
    %9 = tpu.matmul %7, %8, %cst_7 {dimension_numbers = #tpu.dot_dimension_numbers<[1], [0], [0], [1], [0, 0, 1, 1], [], []>} : vector<16x32xbf16>, vector<32x32xbf16>, vector<16x32xf32> -> vector<16x32xf32>
    %c0_8 = arith.constant 0 : index
    %c0_9 = arith.constant 0 : index
    %10 = vector.load %arg8[%c0_8, %c0_9] : memref<1x32xf32, #tpu.memory_space<vmem>>, vector<1x32xf32>
    %11 = vector.broadcast %10 : vector<1x32xf32> to vector<16x32xf32>
    %12 = arith.addf %9, %11 : vector<16x32xf32>
    %cst_10 = arith.constant 0.000000e+00 : f32
    %13 = vector.broadcast %cst_10 : f32 to vector<16x32xf32>
    %14 = arith.cmpf ogt, %12, %13 : vector<16x32xf32>
    %15 = math.exp %12 : vector<16x32xf32>
    %cst_11 = arith.constant 1.000000e+00 : f32
    %16 = vector.broadcast %cst_11 : f32 to vector<16x32xf32>
    %17 = arith.subf %15, %16 : vector<16x32xf32>
    %18 = arith.select %14, %12, %17 : vector<16x32xi1>, vector<16x32xf32>
    %19 = arith.truncf %18 : vector<16x32xf32> to vector<16x32xbf16>
    %c0_12 = arith.constant 0 : index
    %c0_13 = arith.constant 0 : index
    %20 = vector.load %arg5[%c0_12, %c0_13] : memref<32x32xbf16, #tpu.memory_space<vmem>>, vector<32x32xbf16>
    %cst_14 = arith.constant dense<0.000000e+00> : vector<16x32xf32>
    %21 = tpu.matmul %19, %20, %cst_14 {dimension_numbers = #tpu.dot_dimension_numbers<[1], [0], [0], [1], [0, 0, 1, 1], [], []>} : vector<16x32xbf16>, vector<32x32xbf16>, vector<16x32xf32> -> vector<16x32xf32>
    %c0_15 = arith.constant 0 : index
    %c0_16 = arith.constant 0 : index
    %22 = vector.load %arg10[%c0_15, %c0_16] : memref<1x32xf32, #tpu.memory_space<vmem>>, vector<1x32xf32>
    %23 = vector.broadcast %22 : vector<1x32xf32> to vector<16x32xf32>
    %24 = arith.addf %21, %23 : vector<16x32xf32>
    %25 = arith.negf %24 : vector<16x32xf32>
    %26 = math.exp %25 : vector<16x32xf32>
    %cst_17 = arith.constant 1.000000e+00 : f32
    %27 = vector.broadcast %cst_17 : f32 to vector<16x32xf32>
    %28 = arith.addf %27, %26 : vector<16x32xf32>
    %29 = arith.divf %27, %28 : vector<16x32xf32>
    %c0_18 = arith.constant 0 : index
    %c0_19 = arith.constant 0 : index
    %30 = vector.load %arg6[%c0_18, %c0_19] : memref<32x32xbf16, #tpu.memory_space<vmem>>, vector<32x32xbf16>
    %cst_20 = arith.constant dense<0.000000e+00> : vector<16x32xf32>
    %31 = tpu.matmul %19, %30, %cst_20 {dimension_numbers = #tpu.dot_dimension_numbers<[1], [0], [0], [1], [0, 0, 1, 1], [], []>} : vector<16x32xbf16>, vector<32x32xbf16>, vector<16x32xf32> -> vector<16x32xf32>
    %c0_21 = arith.constant 0 : index
    %c0_22 = arith.constant 0 : index
    %32 = vector.load %arg11[%c0_21, %c0_22] : memref<1x32xf32, #tpu.memory_space<vmem>>, vector<1x32xf32>
    %33 = vector.broadcast %32 : vector<1x32xf32> to vector<16x32xf32>
    %34 = arith.addf %31, %33 : vector<16x32xf32>
    %35 = arith.mulf %29, %34 : vector<16x32xf32>
    %c0_23 = arith.constant 0 : index
    %c0_24 = arith.constant 0 : index
    %36 = vector.load %arg4[%c0_23, %c0_24] : memref<32x32xbf16, #tpu.memory_space<vmem>>, vector<32x32xbf16>
    %cst_25 = arith.constant dense<0.000000e+00> : vector<16x32xf32>
    %37 = tpu.matmul %1, %36, %cst_25 {dimension_numbers = #tpu.dot_dimension_numbers<[1], [0], [0], [1], [0, 0, 1, 1], [], []>} : vector<16x32xbf16>, vector<32x32xbf16>, vector<16x32xf32> -> vector<16x32xf32>
    %c0_26 = arith.constant 0 : index
    %c0_27 = arith.constant 0 : index
    %38 = vector.load %arg9[%c0_26, %c0_27] : memref<1x32xf32, #tpu.memory_space<vmem>>, vector<1x32xf32>
    %39 = vector.broadcast %38 : vector<1x32xf32> to vector<16x32xf32>
    %40 = arith.addf %37, %39 : vector<16x32xf32>
    %41 = arith.addf %40, %35 : vector<16x32xf32>
    %cst_28 = arith.constant dense<0.000000e+00> : vector<16xf32>
    %42 = vector.multi_reduction <add>, %41, %cst_28 [1] : vector<16x32xf32> to vector<16xf32>
    %43 = vector.shape_cast %42 : vector<16xf32> to vector<16x1xf32>
    %cst_29 = arith.constant 3.125000e-02 : f32
    %44 = vector.broadcast %cst_29 : f32 to vector<16x1xf32>
    %45 = arith.mulf %43, %44 : vector<16x1xf32>
    %46 = vector.broadcast %45 : vector<16x1xf32> to vector<16x32xf32>
    %47 = arith.subf %41, %46 : vector<16x32xf32>
    %48 = arith.mulf %47, %47 : vector<16x32xf32>
    %cst_30 = arith.constant dense<0.000000e+00> : vector<16xf32>
    %49 = vector.multi_reduction <add>, %48, %cst_30 [1] : vector<16x32xf32> to vector<16xf32>
    %50 = vector.shape_cast %49 : vector<16xf32> to vector<16x1xf32>
    %cst_31 = arith.constant 3.125000e-02 : f32
    %51 = vector.broadcast %cst_31 : f32 to vector<16x1xf32>
    %52 = arith.mulf %50, %51 : vector<16x1xf32>
    %cst_32 = arith.constant 9.99999974E-6 : f32
    %53 = vector.broadcast %cst_32 : f32 to vector<16x1xf32>
    %54 = arith.addf %52, %53 : vector<16x1xf32>
    %55 = math.rsqrt %54 : vector<16x1xf32>
    %56 = vector.broadcast %55 : vector<16x1xf32> to vector<16x32xf32>
    %57 = arith.mulf %47, %56 : vector<16x32xf32>
    %c0_33 = arith.constant 0 : index
    %c0_34 = arith.constant 0 : index
    %58 = vector.load %arg12[%c0_33, %c0_34] : memref<1x32xf32, #tpu.memory_space<vmem>>, vector<1x32xf32>
    %59 = vector.broadcast %58 : vector<1x32xf32> to vector<16x32xf32>
    %60 = arith.mulf %57, %59 : vector<16x32xf32>
    %c0_35 = arith.constant 0 : index
    %c0_36 = arith.constant 0 : index
    %61 = vector.load %arg13[%c0_35, %c0_36] : memref<1x32xf32, #tpu.memory_space<vmem>>, vector<1x32xf32>
    %62 = vector.broadcast %61 : vector<1x32xf32> to vector<16x32xf32>
    %63 = arith.addf %60, %62 : vector<16x32xf32>
    %c0_37 = arith.constant 0 : index
    %c0_38 = arith.constant 0 : index
    %64 = vector.load %arg14[%c0_37, %c0_38] : memref<16x32xf32, #tpu.memory_space<vmem>>, vector<16x32xf32>
    tpu.vector_store %arg14[%c0_37, %c0_38], %63 {strides = array<i32>} : memref<16x32xf32, #tpu.memory_space<vmem>>, vector<16x32xf32>,
    return
  }
  func.func @transform_0(%arg0: i32) -> (i32, i32) {
    %c0_i32 = arith.constant 0 : i32
    %c0_i32_0 = arith.constant 0 : i32
    return %arg0, %c0_i32 : i32, i32
  }
  func.func @transform_1(%arg0: i32) -> (i32, i32) {
    %c0_i32 = arith.constant 0 : i32
    %c0_i32_0 = arith.constant 0 : i32
    %c0_i32_1 = arith.constant 0 : i32
    return %c0_i32, %c0_i32_0 : i32, i32
  }
  func.func @transform_2(%arg0: i32) -> (i32, i32) {
    %c0_i32 = arith.constant 0 : i32
    %c0_i32_0 = arith.constant 0 : i32
    %c0_i32_1 = arith.constant 0 : i32
    return %c0_i32, %c0_i32_0 : i32, i32
  }
  func.func @transform_3(%arg0: i32) -> (i32, i32) {
    %c0_i32 = arith.constant 0 : i32
    %c0_i32_0 = arith.constant 0 : i32
    %c0_i32_1 = arith.constant 0 : i32
    return %c0_i32, %c0_i32_0 : i32, i32
  }
  func.func @transform_4(%arg0: i32) -> (i32, i32) {
    %c0_i32 = arith.constant 0 : i32
    %c0_i32_0 = arith.constant 0 : i32
    %c0_i32_1 = arith.constant 0 : i32
    return %c0_i32, %c0_i32_0 : i32, i32
  }
  func.func @transform_5(%arg0: i32) -> (i32, i32) {
    %c0_i32 = arith.constant 0 : i32
    %c0_i32_0 = arith.constant 0 : i32
    %c0_i32_1 = arith.constant 0 : i32
    return %c0_i32, %c0_i32_0 : i32, i32
  }
  func.func @transform_6(%arg0: i32) -> (i32, i32) {
    %c0_i32 = arith.constant 0 : i32
    %c0_i32_0 = arith.constant 0 : i32
    %c0_i32_1 = arith.constant 0 : i32
    return %c0_i32, %c0_i32_0 : i32, i32
  }
  func.func @transform_7(%arg0: i32) -> (i32, i32) {
    %c0_i32 = arith.constant 0 : i32
    %c0_i32_0 = arith.constant 0 : i32
    %c0_i32_1 = arith.constant 0 : i32
    return %c0_i32, %c0_i32_0 : i32, i32
  }
  func.func @transform_8(%arg0: i32) -> (i32, i32) {
    %c0_i32 = arith.constant 0 : i32
    %c0_i32_0 = arith.constant 0 : i32
    %c0_i32_1 = arith.constant 0 : i32
    return %c0_i32, %c0_i32_0 : i32, i32
  }
  func.func @transform_9(%arg0: i32) -> (i32, i32) {
    %c0_i32 = arith.constant 0 : i32
    %c0_i32_0 = arith.constant 0 : i32
    %c0_i32_1 = arith.constant 0 : i32
    return %c0_i32, %c0_i32_0 : i32, i32
  }
  func.func @transform_10(%arg0: i32) -> (i32, i32) {
    %c0_i32 = arith.constant 0 : i32
    %c0_i32_0 = arith.constant 0 : i32
    %c0_i32_1 = arith.constant 0 : i32
    return %c0_i32, %c0_i32_0 : i32, i32
  }
  func.func @transform_11(%arg0: i32) -> (i32, i32) {
    %c0_i32 = arith.constant 0 : i32
    %c0_i32_0 = arith.constant 0 : i32
    %c0_i32_1 = arith.constant 0 : i32
    return %c0_i32, %c0_i32_0 : i32, i32
  }
  func.func @transform_12(%arg0: i32) -> (i32, i32) {
    %c0_i32 = arith.constant 0 : i32
    %c0_i32_0 = arith.constant 0 : i32
    %c0_i32_1 = arith.constant 0 : i32
    return %c0_i32, %c0_i32_0 : i32, i32
  }
  func.func @transform_13(%arg0: i32) -> (i32, i32) {
    %c0_i32 = arith.constant 0 : i32
    %c0_i32_0 = arith.constant 0 : i32
    return %arg0, %c0_i32 : i32, i32
  }
}

</mosaic_0001>

<llo_original>
// kernel: gated_residual_network.1
$region0: #{gated_residual_network.1}
  #allocation0 [shape = 'u32[]', space=smem, size = 0x4, offset = 0x4, fixed_abs, tag = 'smem constant byte address 0x4 - core index']
  #allocation1 [shape = 'u32[144,128]{1,0:T(1,128)}', space=vmem, size = 0x12000, scoped, tag = 'internal scratch']
  %s0 = inlined_call_operand.vmem [shape: f32[16,32], index: 0, kind: input, shape index: {}]
  %s1 = inlined_call_operand.vmem [shape: bf16[32,32], index: 1, kind: input, shape index: {}]
  %s2 = inlined_call_operand.vmem [shape: bf16[32,32], index: 2, kind: input, shape index: {}]
  %s3 = inlined_call_operand.vmem [shape: bf16[32,32], index: 3, kind: input, shape index: {}]
  %s4 = inlined_call_operand.vmem [shape: bf16[32,32], index: 4, kind: input, shape index: {}]
  %s5 = inlined_call_operand.vmem [shape: bf16[32,32], index: 5, kind: input, shape index: {}]
  %s6 = inlined_call_operand.vmem [shape: f32[1,32], index: 6, kind: input, shape index: {}]
  %s7 = inlined_call_operand.vmem [shape: f32[1,32], index: 7, kind: input, shape index: {}]
  %s8 = inlined_call_operand.vmem [shape: f32[1,32], index: 8, kind: input, shape index: {}]
  %s9 = inlined_call_operand.vmem [shape: f32[1,32], index: 9, kind: input, shape index: {}]
  %s10 = inlined_call_operand.vmem [shape: f32[1,32], index: 10, kind: input, shape index: {}]
  %s11 = inlined_call_operand.vmem [shape: f32[1,32], index: 11, kind: input, shape index: {}]
  %s12 = inlined_call_operand.vmem [shape: f32[1,32], index: 12, kind: input, shape index: {}]
  %s13 = inlined_call_operand.hbm [shape: f32[16,32], index: 13, kind: output, shape index: {}]
  %s14 = sld [smem:[#allocation0]]
  $region62: #{gated_residual_network.1} parent=0
    _
  %s16 = ssub.s32 1, %s14
  %s17 = scalar_select 0, %s16, %s14
  $region1: #{gated_residual_network.1} parent=0
    #allocation2 [shape = 'u8[8192]{0}', space=vmem, size = 0x2000, scoped, tag = 'output window, operand 0, single buffered']
    #allocation3 [shape = 's32[1]{0}', space=sflag, size = 0x4, scoped, tag = 'scoped memory for gated_residual_network.1']
    %18 = vsyncpa [#allocation3], 0
    // Predicated region
    $region2: #{gated_residual_network.1} parent=1 // pred_check
      _
    $region3: #{gated_residual_network.1} parent=1 // pred_check_branch
      %20 = sbr.rel (0) target = $region5
    $region4: #{gated_residual_network.1} parent=1 // pred_region
      _
    $region5: #{gated_residual_network.1} parent=1 // pred_fallthru
      _
    // Predicated region
    $region6: #{gated_residual_network.1} parent=1 // pred_check
      _
    $region7: #{gated_residual_network.1} parent=1 // pred_check_branch
      %22 = sbr.rel (0) target = $region9
    $region8: #{gated_residual_network.1} parent=1 // pred_region
      _
    $region9: #{gated_residual_network.1} parent=1 // pred_fallthru
      _
    // Predicated region
    $region10: #{gated_residual_network.1} parent=1 // pred_check
      _
    $region11: #{gated_residual_network.1} parent=1 // pred_check_branch
      %24 = sbr.rel (0) target = $region13
    $region12: #{gated_residual_network.1} parent=1 // pred_region
      _
    $region13: #{gated_residual_network.1} parent=1 // pred_fallthru
      _
    // Predicated region
    $region14: #{gated_residual_network.1} parent=1 // pred_check
      _
    $region15: #{gated_residual_network.1} parent=1 // pred_check_branch
      %26 = sbr.rel (0) target = $region17
    $region16: #{gated_residual_network.1} parent=1 // pred_region
      _
    $region17: #{gated_residual_network.1} parent=1 // pred_fallthru
      _
    // Predicated region
    $region18: #{gated_residual_network.1} parent=1 // pred_check
      _
    $region19: #{gated_residual_network.1} parent=1 // pred_check_branch
      %28 = sbr.rel (0) target = $region21
    $region20: #{gated_residual_network.1} parent=1 // pred_region
      _
    $region21: #{gated_residual_network.1} parent=1 // pred_fallthru
      _
    // Predicated region
    $region22: #{gated_residual_network.1} parent=1 // pred_check
      _
    $region23: #{gated_residual_network.1} parent=1 // pred_check_branch
      %30 = sbr.rel (0) target = $region25
    $region24: #{gated_residual_network.1} parent=1 // pred_region
      _
    $region25: #{gated_residual_network.1} parent=1 // pred_fallthru
      _
    // Predicated region
    $region26: #{gated_residual_network.1} parent=1 // pred_check
      _
    $region27: #{gated_residual_network.1} parent=1 // pred_check_branch
      %32 = sbr.rel (0) target = $region29
    $region28: #{gated_residual_network.1} parent=1 // pred_region
      _
    $region29: #{gated_residual_network.1} parent=1 // pred_fallthru
      _
    // Predicated region
    $region30: #{gated_residual_network.1} parent=1 // pred_check
      _
    $region31: #{gated_residual_network.1} parent=1 // pred_check_branch
      %34 = sbr.rel (0) target = $region33
    $region32: #{gated_residual_network.1} parent=1 // pred_region
      _
    $region33: #{gated_residual_network.1} parent=1 // pred_fallthru
      _
    // Predicated region
    $region34: #{gated_residual_network.1} parent=1 // pred_check
      _
    $region35: #{gated_residual_network.1} parent=1 // pred_check_branch
      %36 = sbr.rel (0) target = $region37
    $region36: #{gated_residual_network.1} parent=1 // pred_region
      _
    $region37: #{gated_residual_network.1} parent=1 // pred_fallthru
      _
    // Predicated region
    $region38: #{gated_residual_network.1} parent=1 // pred_check
      _
    $region39: #{gated_residual_network.1} parent=1 // pred_check_branch
      %38 = sbr.rel (0) target = $region41
    $region40: #{gated_residual_network.1} parent=1 // pred_region
      _
    $region41: #{gated_residual_network.1} parent=1 // pred_fallthru
      _
    // Predicated region
    $region42: #{gated_residual_network.1} parent=1 // pred_check
      _
    $region43: #{gated_residual_network.1} parent=1 // pred_check_branch
      %40 = sbr.rel (0) target = $region45
    $region44: #{gated_residual_network.1} parent=1 // pred_region
      _
    $region45: #{gated_residual_network.1} parent=1 // pred_fallthru
      _
    // Predicated region
    $region46: #{gated_residual_network.1} parent=1 // pred_check
      _
    $region47: #{gated_residual_network.1} parent=1 // pred_check_branch
      %42 = sbr.rel (0) target = $region49
    $region48: #{gated_residual_network.1} parent=1 // pred_region
      _
    $region49: #{gated_residual_network.1} parent=1 // pred_fallthru
      _
    // Predicated region
    $region50: #{gated_residual_network.1} parent=1 // pred_check
      _
    $region51: #{gated_residual_network.1} parent=1 // pred_check_branch
      %44 = sbr.rel (0) target = $region53
    $region52: #{gated_residual_network.1} parent=1 // pred_region
      _
    $region53: #{gated_residual_network.1} parent=1 // pred_fallthru
      _
    %v46 = vld [vmem:[%s0] sm:$0xff]
    %v47 = vld [vmem:[%s0 + $0x8] sm:$0xff]
    %v48 = vpack.c.bf16 %v47, %v46
    %v49 = vld [vmem:[%s1] sm:$0xf]
    %v50 = vld [vmem:[%s1 + $0x4] sm:$0xf]
    %v51 = vld [vmem:[%s1 + $0x8] sm:$0xf]
    %v52 = vld [vmem:[%s1 + $0xc] sm:$0xf]
    %v53 = vld [vmem:[%s6] sm:$0x1]
    %v55 = vlaneseq
    %v56 = vshrl.u32 %v55, 7
    %v57 = vsub.s32 0, %v56
    %v58 = vrot.slane %v53, %v57
    %v64 = vunpack.c.l.b16 %v49
    %v65 = vunpack.c.l.b16 %v50
    %v66 = vunpack.c.l.b16 %v51
    %v67 = vunpack.c.l.b16 %v52
    %v68 = vpack.c.b16 %v65, %v64
    %v69 = vpack.c.b16 %v67, %v66
    %vm72 = vcmask 261120
    %v74 = vsel %vm72, %v48, 0
    %76 = vmatprep.subr.bf16.mxu0 0
    %77 = vmatpush1.bf16.msra.mxu0 0
    %78 = vmatprep.subr.bf16.mxu0 0
    %79 = vmatpush1.bf16.msra.mxu0 0
    %80 = vmatprep.subr.bf16.mxu0 0
    %81 = vmatpush1.bf16.msra.mxu0 0
    %82 = vmatprep.subr.bf16.mxu0 0
    %83 = vmatpush1.bf16.msra.mxu0 0
    %84 = vmatprep.subr.bf16.mxu0 0
    %85 = vmatpush1.bf16.msra.mxu0 0
    %86 = vmatprep.subr.bf16.mxu0 0
    %87 = vmatpush1.bf16.msra.mxu0 0
    %88 = vmatprep.subr.bf16.mxu0 0
    %89 = vmatpush1.bf16.msra.mxu0 %v69
    %90 = vmatprep.subr.bf16.mxu0 0
    %91 = vmatpush1.bf16.msra.mxu0 %v68
    %92 = vmatprep.subr.bf16.mxu0 0
    %93 = vmatpush2.bf16.msra.mxu0 0
    %94 = vmatprep.subr.bf16.mxu0 0
    %95 = vmatpush2.bf16.msra.mxu0 0
    %96 = vmatprep.subr.bf16.mxu0 0
    %97 = vmatpush2.bf16.msra.mxu0 0
    %98 = vmatprep.subr.bf16.mxu0 0
    %99 = vmatpush2.bf16.msra.mxu0 0
    %100 = vmatprep.subr.bf16.mxu0 0
    %101 = vmatpush2.bf16.msra.mxu0 0
    %102 = vmatprep.subr.bf16.mxu0 0
    %103 = vmatpush2.bf16.msra.mxu0 0
    %104 = vmatprep.subr.bf16.mxu0 0
    %105 = vmatpush2.bf16.msra.mxu0 0
    %106 = vmatprep.subr.bf16.mxu0 0
    %107 = vmatpush2.bf16.msra.mxu0 0
    %108 = vmatprep.mubr.bf16.mxu0 0
    %109 = vmatmul.mubr.bf16.gmra.mxu0 %v74
    %v110 = vpop.f32.mrf.mxu0
    %v111 = vadd.f32 %v58, %v110
    %v112 = vpop.f32.mrf.mxu0
    %v113 = vpop.f32.mrf.mxu0
    %v114 = vadd.f32 %v58, %v113
    %v115 = vpop.f32.mrf.mxu0
    %116 = vdwg.mxu0
    %v117 = vpack.c.bf16 %v114, %v111
    %v118 = vld [vmem:[%s2] sm:$0xf]
    %v119 = vld [vmem:[%s2 + $0x4] sm:$0xf]
    %v120 = vld [vmem:[%s2 + $0x8] sm:$0xf]
    %v121 = vld [vmem:[%s2 + $0xc] sm:$0xf]
    %v122 = vld [vmem:[%s7] sm:$0x1]
    %v124 = vlaneseq
    %v125 = vshrl.u32 %v124, 7
    %v126 = vsub.s32 0, %v125
    %v127 = vrot.slane %v122, %v126
    %v133 = vunpack.c.l.b16 %v118
    %v134 = vunpack.c.l.b16 %v119
    %v135 = vunpack.c.l.b16 %v120
    %v136 = vunpack.c.l.b16 %v121
    %v137 = vpack.c.b16 %v134, %v133
    %v138 = vpack.c.b16 %v136, %v135
    %v142 = vsel %vm72, %v117, 0
    %144 = vmatprep.subr.bf16.mxu0 0
    %145 = vmatpush1.bf16.msra.mxu0 0
    %146 = vmatprep.subr.bf16.mxu0 0
    %147 = vmatpush1.bf16.msra.mxu0 0
    %148 = vmatprep.subr.bf16.mxu0 0
    %149 = vmatpush1.bf16.msra.mxu0 0
    %150 = vmatprep.subr.bf16.mxu0 0
    %151 = vmatpush1.bf16.msra.mxu0 0
    %152 = vmatprep.subr.bf16.mxu0 0
    %153 = vmatpush1.bf16.msra.mxu0 0
    %154 = vmatprep.subr.bf16.mxu0 0
    %155 = vmatpush1.bf16.msra.mxu0 0
    %156 = vmatprep.subr.bf16.mxu0 0
    %157 = vmatpush1.bf16.msra.mxu0 %v138
    %158 = vmatprep.subr.bf16.mxu0 0
    %159 = vmatpush1.bf16.msra.mxu0 %v137
    %160 = vmatprep.subr.bf16.mxu0 0
    %161 = vmatpush2.bf16.msra.mxu0 0
    %162 = vmatprep.subr.bf16.mxu0 0
    %163 = vmatpush2.bf16.msra.mxu0 0
    %164 = vmatprep.subr.bf16.mxu0 0
    %165 = vmatpush2.bf16.msra.mxu0 0
    %166 = vmatprep.subr.bf16.mxu0 0
    %167 = vmatpush2.bf16.msra.mxu0 0
    %168 = vmatprep.subr.bf16.mxu0 0
    %169 = vmatpush2.bf16.msra.mxu0 0
    %170 = vmatprep.subr.bf16.mxu0 0
    %171 = vmatpush2.bf16.msra.mxu0 0
    %172 = vmatprep.subr.bf16.mxu0 0
    %173 = vmatpush2.bf16.msra.mxu0 0
    %174 = vmatprep.subr.bf16.mxu0 0
    %175 = vmatpush2.bf16.msra.mxu0 0
    %176 = vmatprep.mubr.bf16.mxu0 0
    %177 = vmatmul.mubr.bf16.gmra.mxu0 %v142
    %v178 = vpop.f32.mrf.mxu0
    %v179 = vadd.f32 %v127, %v178
    %v180 = vpop.f32.mrf.mxu0
    %v181 = vpop.f32.mrf.mxu0
    %v182 = vadd.f32 %v127, %v181
    %v183 = vpop.f32.mrf.mxu0
    %184 = vdwg.mxu0
    %vm185 = vcmp.gt.f32.partialorder %v179, 0.0
    %vm186 = vcmp.gt.f32.partialorder %v182, 0.0
    %v187 = vmul.f32 %v179, 1.442695
    %v188 = vpow.pop %v187
    %v189 = vmul.f32 %v182, 1.442695
    %v190 = vpow.pop %v189
    %v191 = vsub.f32 %v188, 1.0
    %v192 = vsub.f32 %v190, 1.0
    %v193 = vsel %vm185, %v179, %v191
    %v194 = vsel %vm186, %v182, %v192
    %v195 = vpack.c.bf16 %v194, %v193
    %v196 = vld [vmem:[%s4] sm:$0xf]
    %v197 = vld [vmem:[%s4 + $0x4] sm:$0xf]
    %v198 = vld [vmem:[%s4 + $0x8] sm:$0xf]
    %v199 = vld [vmem:[%s4 + $0xc] sm:$0xf]
    %v200 = vld [vmem:[%s9] sm:$0x1]
    %v202 = vlaneseq
    %v203 = vshrl.u32 %v202, 7
    %v204 = vsub.s32 0, %v203
    %v205 = vrot.slane %v200, %v204
    %v211 = vunpack.c.l.b16 %v196
    %v212 = vunpack.c.l.b16 %v197
    %v213 = vunpack.c.l.b16 %v198
    %v214 = vunpack.c.l.b16 %v199
    %v215 = vpack.c.b16 %v212, %v211
    %v216 = vpack.c.b16 %v214, %v213
    %v220 = vsel %vm72, %v195, 0
    %222 = vmatprep.subr.bf16.mxu0 0
    %223 = vmatpush1.bf16.msra.mxu0 0
    %224 = vmatprep.subr.bf16.mxu0 0
    %225 = vmatpush1.bf16.msra.mxu0 0
    %226 = vmatprep.subr.bf16.mxu0 0
    %227 = vmatpush1.bf16.msra.mxu0 0
    %228 = vmatprep.subr.bf16.mxu0 0
    %229 = vmatpush1.bf16.msra.mxu0 0
    %230 = vmatprep.subr.bf16.mxu0 0
    %231 = vmatpush1.bf16.msra.mxu0 0
    %232 = vmatprep.subr.bf16.mxu0 0
    %233 = vmatpush1.bf16.msra.mxu0 0
    %234 = vmatprep.subr.bf16.mxu0 0
    %235 = vmatpush1.bf16.msra.mxu0 %v216
    %236 = vmatprep.subr.bf16.mxu0 0
    %237 = vmatpush1.bf16.msra.mxu0 %v215
    %238 = vmatprep.subr.bf16.mxu0 0
    %239 = vmatpush2.bf16.msra.mxu0 0
    %240 = vmatprep.subr.bf16.mxu0 0
    %241 = vmatpush2.bf16.msra.mxu0 0
    %242 = vmatprep.subr.bf16.mxu0 0
    %243 = vmatpush2.bf16.msra.mxu0 0
    %244 = vmatprep.subr.bf16.mxu0 0
    %245 = vmatpush2.bf16.msra.mxu0 0
    %246 = vmatprep.subr.bf16.mxu0 0
    %247 = vmatpush2.bf16.msra.mxu0 0
    %248 = vmatprep.subr.bf16.mxu0 0
    %249 = vmatpush2.bf16.msra.mxu0 0
    %250 = vmatprep.subr.bf16.mxu0 0
    %251 = vmatpush2.bf16.msra.mxu0 0
    %252 = vmatprep.subr.bf16.mxu0 0
    %253 = vmatpush2.bf16.msra.mxu0 0
    %254 = vmatprep.mubr.bf16.mxu0 0
    %255 = vmatmul.mubr.bf16.gmra.mxu0 %v220
    %v256 = vpop.f32.mrf.mxu0
    %v257 = vadd.f32 %v205, %v256
    %v258 = vpop.f32.mrf.mxu0
    %v259 = vpop.f32.mrf.mxu0
    %v260 = vadd.f32 %v205, %v259
    %v261 = vpop.f32.mrf.mxu0
    %262 = vdwg.mxu0
    %v263 = vxor.u32 %v257, 2147483648
    %v264 = vxor.u32 %v260, 2147483648
    %v265 = vmul.f32 %v263, 1.442695
    %v266 = vpow.pop %v265
    %v267 = vmul.f32 %v264, 1.442695
    %v268 = vpow.pop %v267
    %v269 = vadd.f32 %v266, 1.0
    %v270 = vadd.f32 %v268, 1.0
    %v271 = vrcp.pop %v269
    %v272 = vmul.f32 1.0, %v271
    %v273 = vrcp.pop %v270
    %v274 = vmul.f32 1.0, %v273
    %v275 = vld [vmem:[%s5] sm:$0xf]
    %v276 = vld [vmem:[%s5 + $0x4] sm:$0xf]
    %v277 = vld [vmem:[%s5 + $0x8] sm:$0xf]
    %v278 = vld [vmem:[%s5 + $0xc] sm:$0xf]
    %v279 = vld [vmem:[%s10] sm:$0x1]
    %v281 = vlaneseq
    %v282 = vshrl.u32 %v281, 7
    %v283 = vsub.s32 0, %v282
    %v284 = vrot.slane %v279, %v283
    %v290 = vunpack.c.l.b16 %v275
    %v291 = vunpack.c.l.b16 %v276
    %v292 = vunpack.c.l.b16 %v277
    %v293 = vunpack.c.l.b16 %v278
    %v294 = vpack.c.b16 %v291, %v290
    %v295 = vpack.c.b16 %v293, %v292
    %298 = vmatprep.subr.bf16.mxu0 0
    %299 = vmatpush1.bf16.msra.mxu0 0
    %300 = vmatprep.subr.bf16.mxu0 0
    %301 = vmatpush1.bf16.msra.mxu0 0
    %302 = vmatprep.subr.bf16.mxu0 0
    %303 = vmatpush1.bf16.msra.mxu0 0
    %304 = vmatprep.subr.bf16.mxu0 0
    %305 = vmatpush1.bf16.msra.mxu0 0
    %306 = vmatprep.subr.bf16.mxu0 0
    %307 = vmatpush1.bf16.msra.mxu0 0
    %308 = vmatprep.subr.bf16.mxu0 0
    %309 = vmatpush1.bf16.msra.mxu0 0
    %310 = vmatprep.subr.bf16.mxu0 0
    %311 = vmatpush1.bf16.msra.mxu0 %v295
    %312 = vmatprep.subr.bf16.mxu0 0
    %313 = vmatpush1.bf16.msra.mxu0 %v294
    %314 = vmatprep.subr.bf16.mxu0 0
    %315 = vmatpush2.bf16.msra.mxu0 0
    %316 = vmatprep.subr.bf16.mxu0 0
    %317 = vmatpush2.bf16.msra.mxu0 0
    %318 = vmatprep.subr.bf16.mxu0 0
    %319 = vmatpush2.bf16.msra.mxu0 0
    %320 = vmatprep.subr.bf16.mxu0 0
    %321 = vmatpush2.bf16.msra.mxu0 0
    %322 = vmatprep.subr.bf16.mxu0 0
    %323 = vmatpush2.bf16.msra.mxu0 0
    %324 = vmatprep.subr.bf16.mxu0 0
    %325 = vmatpush2.bf16.msra.mxu0 0
    %326 = vmatprep.subr.bf16.mxu0 0
    %327 = vmatpush2.bf16.msra.mxu0 0
    %328 = vmatprep.subr.bf16.mxu0 0
    %329 = vmatpush2.bf16.msra.mxu0 0
    %330 = vmatprep.mubr.bf16.mxu0 0
    %331 = vmatmul.mubr.bf16.gmra.mxu0 %v220
    %v332 = vpop.f32.mrf.mxu0
    %v333 = vadd.f32 %v284, %v332
    %v334 = vpop.f32.mrf.mxu0
    %v335 = vpop.f32.mrf.mxu0
    %v336 = vadd.f32 %v284, %v335
    %v337 = vpop.f32.mrf.mxu0
    %338 = vdwg.mxu0
    %v339 = vmul.f32 %v272, %v333
    %v340 = vmul.f32 %v274, %v336
    %v341 = vld [vmem:[%s3] sm:$0xf]
    %v342 = vld [vmem:[%s3 + $0x4] sm:$0xf]
    %v343 = vld [vmem:[%s3 + $0x8] sm:$0xf]
    %v344 = vld [vmem:[%s3 + $0xc] sm:$0xf]
    %v345 = vld [vmem:[%s8] sm:$0x1]
    %v347 = vlaneseq
    %v348 = vshrl.u32 %v347, 7
    %v349 = vsub.s32 0, %v348
    %v350 = vrot.slane %v345, %v349
    %v356 = vunpack.c.l.b16 %v341
    %v357 = vunpack.c.l.b16 %v342
    %v358 = vunpack.c.l.b16 %v343
    %v359 = vunpack.c.l.b16 %v344
    %v360 = vpack.c.b16 %v357, %v356
    %v361 = vpack.c.b16 %v359, %v358
    %364 = vmatprep.subr.bf16.mxu0 0
    %365 = vmatpush1.bf16.msra.mxu0 0
    %366 = vmatprep.subr.bf16.mxu0 0
    %367 = vmatpush1.bf16.msra.mxu0 0
    %368 = vmatprep.subr.bf16.mxu0 0
    %369 = vmatpush1.bf16.msra.mxu0 0
    %370 = vmatprep.subr.bf16.mxu0 0
    %371 = vmatpush1.bf16.msra.mxu0 0
    %372 = vmatprep.subr.bf16.mxu0 0
    %373 = vmatpush1.bf16.msra.mxu0 0
    %374 = vmatprep.subr.bf16.mxu0 0
    %375 = vmatpush1.bf16.msra.mxu0 0
    %376 = vmatprep.subr.bf16.mxu0 0
    %377 = vmatpush1.bf16.msra.mxu0 %v361
    %378 = vmatprep.subr.bf16.mxu0 0
    %379 = vmatpush1.bf16.msra.mxu0 %v360
    %380 = vmatprep.subr.bf16.mxu0 0
    %381 = vmatpush2.bf16.msra.mxu0 0
    %382 = vmatprep.subr.bf16.mxu0 0
    %383 = vmatpush2.bf16.msra.mxu0 0
    %384 = vmatprep.subr.bf16.mxu0 0
    %385 = vmatpush2.bf16.msra.mxu0 0
    %386 = vmatprep.subr.bf16.mxu0 0
    %387 = vmatpush2.bf16.msra.mxu0 0
    %388 = vmatprep.subr.bf16.mxu0 0
    %389 = vmatpush2.bf16.msra.mxu0 0
    %390 = vmatprep.subr.bf16.mxu0 0
    %391 = vmatpush2.bf16.msra.mxu0 0
    %392 = vmatprep.subr.bf16.mxu0 0
    %393 = vmatpush2.bf16.msra.mxu0 0
    %394 = vmatprep.subr.bf16.mxu0 0
    %395 = vmatpush2.bf16.msra.mxu0 0
    %396 = vmatprep.mubr.bf16.mxu0 0
    %397 = vmatmul.mubr.bf16.gmra.mxu0 %v74
    %v398 = vpop.f32.mrf.mxu0
    %v399 = vadd.f32 %v350, %v398
    %v400 = vpop.f32.mrf.mxu0
    %v401 = vpop.f32.mrf.mxu0
    %v402 = vadd.f32 %v350, %v401
    %v403 = vpop.f32.mrf.mxu0
    %404 = vdwg.mxu0
    %v405 = vadd.f32 %v399, %v339
    %v406 = vadd.f32 %v402, %v340
    %v407 = vsel %vm72, %v405, 0.0
    %408 = vadd.xlane.f32.xlu0 %v407
    %v409 = vpop.xlane.xlu0 %408
    %v410 = vsel %vm72, %v406, 0.0
    %411 = vadd.xlane.f32.xlu0 %v410
    %v412 = vpop.xlane.xlu0 %411
    %v413 = vmul.f32 %v409, 0.03125
    %v414 = vmul.f32 %v412, 0.03125
    %v415 = vsub.f32 %v405, %v413
    %v416 = vsub.f32 %v406, %v414
    %v417 = vmul.f32 %v415, %v415
    %v418 = vmul.f32 %v416, %v416
    %v419 = vsel %vm72, %v417, 0.0
    %420 = vadd.xlane.f32.xlu0 %v419
    %v421 = vpop.xlane.xlu0 %420
    %v422 = vsel %vm72, %v418, 0.0
    %423 = vadd.xlane.f32.xlu0 %v422
    %v424 = vpop.xlane.xlu0 %423
    %v425 = vmul.f32 %v421, 0.03125
    %v426 = vmul.f32 %v424, 0.03125
    %v427 = vadd.f32 %v425, 1e-05
    %v428 = vadd.f32 %v426, 1e-05
    %v429 = vrsqrt.pop %v427
    %v430 = vrsqrt.pop %v428
    %v431 = vmul.f32 %v415, %v429
    %v432 = vmul.f32 %v416, %v430
    %v433 = vld [vmem:[%s11] sm:$0x1]
    %v435 = vlaneseq
    %v436 = vshrl.u32 %v435, 7
    %v437 = vsub.s32 0, %v436
    %v438 = vrot.slane %v433, %v437
    %v440 = vmul.f32 %v431, %v438
    %v441 = vmul.f32 %v432, %v438
    %v442 = vld [vmem:[%s12] sm:$0x1]
    %v444 = vlaneseq
    %v445 = vshrl.u32 %v444, 7
    %v446 = vsub.s32 0, %v445
    %v447 = vrot.slane %v442, %v446
    %v449 = vadd.f32 %v440, %v447
    %v450 = vadd.f32 %v441, %v447
    %451 = vst.msk [vmem:[#allocation2] sm:$0xff] %vm72, %v449
    %452 = vst.msk [vmem:[#allocation2 + $0x8] sm:$0xff] %vm72, %v450
    // Predicated region
    $region54: #{gated_residual_network.1} parent=1 // pred_check
      _
    $region55: #{gated_residual_network.1} parent=1 // pred_check_branch
      %454 = sbr.rel (0) target = $region57
    $region56: #{gated_residual_network.1} parent=1 // pred_region
      %s456 = ssub.s32 256, 256
      %457 = vsyncadd [#allocation3], %s456
      %s458 = sshll.u32 [#allocation2], 4
      %s459 = int_to_ptr.vmem [resolvable:$true] %s458
      %464 = dma.vmem_to_hbm [thread:$0]  %s459, 256, %s13, [#allocation3], 128, 128, 8
    $region57: #{gated_residual_network.1} parent=1 // pred_fallthru
      _
    // Predicated region
    $region58: #{gated_residual_network.1} parent=1 // pred_check
      _
    $region59: #{gated_residual_network.1} parent=1 // pred_check_branch
      %466 = sbr.rel (0) target = $region61
    $region60: #{gated_residual_network.1} parent=1 // pred_region
      %467 = dma.done [#allocation3], 256
    $region61: #{gated_residual_network.1} parent=1 // pred_fallthru
      _
    %468 = vsyncpa [#allocation3], 1

</llo_original>
